<compile_context>
chip_gen: v7x
topology: tpu7x:2x2x1
jax: 0.10.0
libtpu: 0.0.40
codegen_flags: <defaults>
</compile_context>

<pallas_src>
import functools

import jax
import jax.numpy as jnp
from jax import lax
from jax.experimental import pallas as pl
from jax.experimental.pallas import tpu as pltpu


def _round_up(x, m):
    return (x + m - 1) // m * m


def _gelu_tanh(v1):
    # Same math as the PyTorch forward (tanh-approx GELU), reassociated to save
    # VALU multiplies:
    #   v2 = 0.5*v1 ; v3 = v1 + 0.044715*v1^3 ; v4 = 0.7978845608028654*v3
    #   out = v2 * (tanh(v4) + 1)
    v1sq = v1 * v1
    v4 = (v1 + v1 * v1sq * 0.044715) * 0.7978845608028654
    v5 = jnp.tanh(v4)                     # EUP slot, effectively free next to the VALU work
    return (v1 * 0.5) * (v5 + 1.0)


# ----------------------------------------------------------------------------------------
# Tiny-problem fast path: one program, everything resident in VMEM.
# ----------------------------------------------------------------------------------------
def _small_linear_gelu_kernel(x_ref, w_ref, b_ref, o_ref, *, in_features):
    # x: (B, IN) f32, w: (IN, OUT) f32 (pre-transposed), b: (1, OUT), o: (B, OUT).
    # IN is tiny (3 for this module) -> contract with IN broadcast-FMA VPU ops
    # instead of an MXU matmul; bias + GELU fused in the same body.
    acc = b_ref[...].astype(jnp.float32)          # (1, OUT), broadcasts to (B, OUT) on first add
    for k in range(in_features):                  # static unroll (IN <= 16 guaranteed by wrapper)
        acc = acc + x_ref[:, k:k + 1] * w_ref[k:k + 1, :]
    o_ref[...] = _gelu_tanh(acc).astype(o_ref.dtype)


# ----------------------------------------------------------------------------------------
# General tiled path: MXU matmul with the output block as the K-axis accumulator.
# ----------------------------------------------------------------------------------------
def _tiled_linear_gelu_kernel(x_ref, w_ref, b_ref, o_ref):
    # x: (TM, TK), w: (TK, TN) (weight pre-transposed once in the wrapper), b: (1, TN),
    # o: (TM, TN) f32, resident across the k axis -> doubles as the accumulator.
    k = pl.program_id(2)

    @pl.when(k == 0)
    def _():
        o_ref[...] = jnp.zeros_like(o_ref)

    o_ref[...] += jnp.dot(x_ref[...], w_ref[...], preferred_element_type=jnp.float32)

    # Bias + GELU epilogue only once, after the full K reduction.
    @pl.when(k == pl.num_programs(2) - 1)
    def _():
        o_ref[...] = _gelu_tanh(o_ref[...] + b_ref[...]).astype(o_ref.dtype)


def _vmem_cap_bytes():
    try:
        return int(pltpu.get_tpu_info().vmem_capacity_bytes)
    except Exception:
        return 64 * 1024 * 1024           # conservative default (v7x per-TC VMEM)


def linear_gelu_tanh(x, weight, bias, *, tm=256, tn=512, tk=512):
    """Fused y = gelu_tanh(x @ weight.T + bias).

    x: (B, IN) f32, weight: (OUT, IN) f32 (PyTorch layout), bias: (OUT,) f32.
    """
    B, IN = x.shape
    OUT, IN_w = weight.shape
    assert IN_w == IN, "weight must be (out_features, in_features)"

    # --- Tiny-problem fast path (this module: Linear(3, 8)) ------------------------------
    if IN <= 16 and OUT <= 1024 and B <= 4096:
        kernel = functools.partial(_small_linear_gelu_kernel, in_features=IN)
        return pl.pallas_call(
            kernel,
            out_shape=jax.ShapeDtypeStruct((B, OUT), x.dtype),
            in_specs=[
                pl.BlockSpec(memory_space=pltpu.MemorySpace.VMEM),   # x       (B, IN)
                pl.BlockSpec(memory_space=pltpu.MemorySpace.VMEM),   # weight  (IN, OUT)
                pl.BlockSpec(memory_space=pltpu.MemorySpace.VMEM),   # bias    (1, OUT)
            ],
            out_specs=pl.BlockSpec(memory_space=pltpu.MemorySpace.VMEM),
            cost_estimate=pl.CostEstimate(
                flops=2 * B * OUT * IN + 8 * B * OUT,
                transcendentals=B * OUT,
                bytes_accessed=4 * (B * IN + IN * OUT + OUT + B * OUT),
            ),
        )(x, weight.T, bias.reshape(1, OUT))

    # --- General tiled path ----------------------------------------------------------------
    TM = min(tm, _round_up(B, 8))
    TN = min(tn, _round_up(OUT, 128))
    TK = min(tk, _round_up(IN, 128))
    M, N, K = _round_up(B, TM), _round_up(OUT, TN), _round_up(IN, TK)

    # One-time relayout of the weight to (K, N): lane-dense N for the DMA and MXU,
    # no per-tile XLU transpose inside the K loop.
    w_t = weight.T
    x_p = x if (M == B and K == IN) else jnp.pad(x, ((0, M - B), (0, K - IN)))
    w_p = w_t if (K == IN and N == OUT) else jnp.pad(w_t, ((0, K - IN), (0, N - OUT)))
    b_p = bias.reshape(1, OUT) if N == OUT else jnp.pad(bias, (0, N - OUT)).reshape(1, N)

    grid = (M // TM, N // TN, K // TK)

    # VMEM budget: double-buffered inputs + resident f32 output tile, clamped to the
    # device's actual VMEM (v7x has 64 MiB per TC vs 128 MiB on v5e/v6e).
    tile_bytes = 4 * (2 * (TM * TK + TK * TN + TN) + TM * TN)
    vmem_limit = min(max(32 * 1024 * 1024, 2 * tile_bytes), (_vmem_cap_bytes() * 7) // 8)

    out = pl.pallas_call(
        _tiled_linear_gelu_kernel,
        out_shape=jax.ShapeDtypeStruct((M, N), jnp.float32),
        grid_spec=pltpu.PrefetchScalarGridSpec(
            num_scalar_prefetch=0,
            grid=grid,
            in_specs=[
                pl.BlockSpec((TM, TK), lambda i, j, k: (i, k)),   # x tile
                pl.BlockSpec((TK, TN), lambda i, j, k: (k, j)),   # weight tile (K, N)
                pl.BlockSpec((1, TN), lambda i, j, k: (0, j)),    # bias tile
            ],
            out_specs=pl.BlockSpec((TM, TN), lambda i, j, k: (i, j)),
        ),
        compiler_params=pltpu.CompilerParams(
            dimension_semantics=("parallel", "parallel", "arbitrary"),
            vmem_limit_bytes=vmem_limit,
        ),
        cost_estimate=pl.CostEstimate(            # true sizes, not padded halo
            flops=2 * B * OUT * IN + 8 * B * OUT,
            transcendentals=B * OUT,
            bytes_accessed=4 * (B * IN + IN * OUT + OUT + B * OUT),
        ),
    )(x_p, w_p, b_p)
    # TODO(synk): optional bf16 cast of the x/w tiles (f32 accumulation) for 2-4x MXU
    # throughput on v6e/v7x when reduced operand precision is acceptable.
    return out[:B, :OUT].astype(x.dtype)


def _reference(x, weight, bias):
    v1 = jnp.einsum("bi,oi->bo", x, weight, precision=lax.Precision.HIGHEST) + bias
    v2 = v1 * 0.5
    v3 = v1 + v1 * v1 * v1 * 0.044715
    v4 = v3 * 0.7978845608028654
    v5 = jnp.tanh(v4)
    v6 = v5 + 1.0
    return v2 * v6


if __name__ == "__main__":
    key = jax.random.PRNGKey(0)
    k_x, k_w, k_b = jax.random.split(key, 3)

    # Shapes implied by the module: Linear(3, 8), small batch.
    B, IN, OUT = 4, 3, 8
    bound = 1.0 / (IN ** 0.5)            # mimic PyTorch Linear's uniform init bound
    weight = jax.random.uniform(k_w, (OUT, IN), jnp.float32, -bound, bound)
    bias = jax.random.uniform(k_b, (OUT,), jnp.float32, -bound, bound)
    x = jax.random.normal(k_x, (B, IN), jnp.float32)

    out = jax.block_until_ready(linear_gelu_tanh(x, weight, bias))
    ref = _reference(x, weight, bias)
    assert out.shape == (B, OUT)
    assert jnp.allclose(out, ref, atol=1e-5, rtol=1e-5), "tiny-path mismatch vs reference"

    # Smoke-test the general tiled (MXU) path at a modest aligned shape as well.
    k_x2, k_w2, k_b2 = jax.random.split(jax.random.PRNGKey(1), 3)
    B2, IN2, OUT2 = 256, 384, 512
    w2 = jax.random.normal(k_w2, (OUT2, IN2), jnp.float32) * 0.05
    b2 = jax.random.normal(k_b2, (OUT2,), jnp.float32) * 0.05
    x2 = jax.random.normal(k_x2, (B2, IN2), jnp.float32)
    out2 = jax.block_until_ready(linear_gelu_tanh(x2, w2, b2))
    ref2 = _reference(x2, w2, b2)
    assert out2.shape == (B2, OUT2)
    assert jnp.allclose(out2, ref2, atol=2e-2, rtol=2e-2), "tiled-path mismatch vs reference"

    print("KERNEL_OK")
</pallas_src>

<mosaic_0001>
module attributes {stable_mosaic.version = 11 : i64} {
  func.func @_small_linear_gelu_kernel(%arg0: memref<4x3xf32, #tpu.memory_space<vmem>>, %arg1: memref<3x8xf32, #tpu.memory_space<vmem>>, %arg2: memref<1x8xf32, #tpu.memory_space<vmem>>, %arg3: memref<4x8xf32, #tpu.memory_space<vmem>>) attributes {dimension_semantics = [], scalar_prefetch = 0 : i64, scratch_operands = 0 : i64, tpu.core_type = #tpu.core_type<tc>} {
    %c0 = arith.constant 0 : index
    %c0_0 = arith.constant 0 : index
    %0 = vector.load %arg2[%c0, %c0_0] : memref<1x8xf32, #tpu.memory_space<vmem>>, vector<1x8xf32>
    %c0_1 = arith.constant 0 : index
    %c0_2 = arith.constant 0 : index
    %1 = vector.load %arg0[%c0_1, %c0_2] : memref<4x3xf32, #tpu.memory_space<vmem>>, vector<4x1xf32>
    %c0_3 = arith.constant 0 : index
    %c0_4 = arith.constant 0 : index
    %2 = vector.load %arg1[%c0_3, %c0_4] : memref<3x8xf32, #tpu.memory_space<vmem>>, vector<1x8xf32>
    %3 = vector.broadcast %1 : vector<4x1xf32> to vector<4x8xf32>
    %4 = vector.broadcast %2 : vector<1x8xf32> to vector<4x8xf32>
    %5 = arith.mulf %3, %4 : vector<4x8xf32>
    %6 = vector.broadcast %0 : vector<1x8xf32> to vector<4x8xf32>
    %7 = arith.addf %6, %5 : vector<4x8xf32>
    %c0_5 = arith.constant 0 : index
    %c1 = arith.constant 1 : index
    %8 = vector.load %arg0[%c0_5, %c1] : memref<4x3xf32, #tpu.memory_space<vmem>>, vector<4x1xf32>
    %c1_6 = arith.constant 1 : index
    %c0_7 = arith.constant 0 : index
    %9 = vector.load %arg1[%c1_6, %c0_7] : memref<3x8xf32, #tpu.memory_space<vmem>>, vector<1x8xf32>
    %10 = vector.broadcast %8 : vector<4x1xf32> to vector<4x8xf32>
    %11 = vector.broadcast %9 : vector<1x8xf32> to vector<4x8xf32>
    %12 = arith.mulf %10, %11 : vector<4x8xf32>
    %13 = arith.addf %7, %12 : vector<4x8xf32>
    %c0_8 = arith.constant 0 : index
    %c2 = arith.constant 2 : index
    %14 = vector.load %arg0[%c0_8, %c2] : memref<4x3xf32, #tpu.memory_space<vmem>>, vector<4x1xf32>
    %c2_9 = arith.constant 2 : index
    %c0_10 = arith.constant 0 : index
    %15 = vector.load %arg1[%c2_9, %c0_10] : memref<3x8xf32, #tpu.memory_space<vmem>>, vector<1x8xf32>
    %16 = vector.broadcast %14 : vector<4x1xf32> to vector<4x8xf32>
    %17 = vector.broadcast %15 : vector<1x8xf32> to vector<4x8xf32>
    %18 = arith.mulf %16, %17 : vector<4x8xf32>
    %19 = arith.addf %13, %18 : vector<4x8xf32>
    %20 = arith.mulf %19, %19 : vector<4x8xf32>
    %21 = arith.mulf %19, %20 : vector<4x8xf32>
    %cst = arith.constant 4.471500e-02 : f32
    %22 = vector.broadcast %cst : f32 to vector<4x8xf32>
    %23 = arith.mulf %21, %22 : vector<4x8xf32>
    %24 = arith.addf %19, %23 : vector<4x8xf32>
    %cst_11 = arith.constant 0.797884583 : f32
    %25 = vector.broadcast %cst_11 : f32 to vector<4x8xf32>
    %26 = arith.mulf %24, %25 : vector<4x8xf32>
    %27 = math.tanh %26 : vector<4x8xf32>
    %cst_12 = arith.constant 5.000000e-01 : f32
    %28 = vector.broadcast %cst_12 : f32 to vector<4x8xf32>
    %29 = arith.mulf %19, %28 : vector<4x8xf32>
    %cst_13 = arith.constant 1.000000e+00 : f32
    %30 = vector.broadcast %cst_13 : f32 to vector<4x8xf32>
    %31 = arith.addf %27, %30 : vector<4x8xf32>
    %32 = arith.mulf %29, %31 : vector<4x8xf32>
    %c0_14 = arith.constant 0 : index
    %c0_15 = arith.constant 0 : index
    %33 = vector.load %arg3[%c0_14, %c0_15] : memref<4x8xf32, #tpu.memory_space<vmem>>, vector<4x8xf32>
    tpu.vector_store %arg3[%c0_14, %c0_15], %32 {strides = array<i32>} : memref<4x8xf32, #tpu.memory_space<vmem>>, vector<4x8xf32>,
    return
  }
}

</mosaic_0001>

<llo_original>
// kernel: tpu_custom_call.1
$region0: #{tpu_custom_call.1}
  #allocation0 [shape = 'u32[]', space=smem, size = 0x4, offset = 0x4, fixed_abs, tag = 'smem constant byte address 0x4 - core index']
  #allocation1 [shape = 'u32[144,128]{1,0:T(1,128)}', space=vmem, size = 0x12000, scoped, tag = 'internal scratch']
  %s0 = inlined_call_operand.hbm [shape: f32[4,3], index: 0, kind: input, shape index: {}]
  %s1 = inlined_call_operand.hbm [shape: f32[3,8], index: 1, kind: input, shape index: {}]
  %s2 = inlined_call_operand.vmem [shape: f32[1,8], index: 2, kind: input, shape index: {}]
  %s3 = inlined_call_operand.hbm [shape: f32[4,8], index: 3, kind: output, shape index: {}]
  %s4 = sld [smem:[#allocation0]]
  $region30: #{tpu_custom_call.1} parent=0
    _
  %s6 = ssub.s32 1, %s4
  %s7 = scalar_select 0, %s6, %s4
  $region1: #{tpu_custom_call.1} parent=0
    #allocation2 [shape = 'u8[2048]{0}', space=vmem, size = 0x800, scoped, tag = 'input window, operand 0, single buffered']
    #allocation3 [shape = 's32[1]{0}', space=sflag, size = 0x4, scoped, tag = 'scoped memory for tpu_custom_call.1']
    #allocation4 [shape = 's32[1]{0}', space=sflag, size = 0x4, scoped, tag = 'scoped memory for tpu_custom_call.1']
    #allocation5 [shape = 'u8[2048]{0}', space=vmem, size = 0x800, scoped, tag = 'input window, operand 1, single buffered']
    #allocation6 [shape = 's32[1]{0}', space=sflag, size = 0x4, scoped, tag = 'scoped memory for tpu_custom_call.1']
    #allocation7 [shape = 'u8[2048]{0}', space=vmem, size = 0x800, scoped, tag = 'output window, operand 0, single buffered']
    %8 = vsyncpa [#allocation3], 0
    %9 = vsyncpa [#allocation6], 0
    %10 = vsyncpa [#allocation4], 0
    // Predicated region
    $region2: #{tpu_custom_call.1} parent=1 // pred_check
      _
    $region3: #{tpu_custom_call.1} parent=1 // pred_check_branch
      %12 = sbr.rel (0) target = $region5
    $region4: #{tpu_custom_call.1} parent=1 // pred_region
      %s14 = ssub.s32 64, 64
      %15 = vsyncadd [#allocation3], %s14
      %s17 = sshll.u32 [#allocation2], 4
      %s18 = int_to_ptr.vmem [resolvable:$true] %s17
      %20 = dma.hbm_to_vmem [thread:$0]  %s0, 64, %s18, [#allocation3]
    $region5: #{tpu_custom_call.1} parent=1 // pred_fallthru
      _
    // Predicated region
    $region6: #{tpu_custom_call.1} parent=1 // pred_check
      _
    $region7: #{tpu_custom_call.1} parent=1 // pred_check_branch
      %22 = sbr.rel (0) target = $region9
    $region8: #{tpu_custom_call.1} parent=1 // pred_region
      %s24 = ssub.s32 64, 64
      %25 = vsyncadd [#allocation6], %s24
      %s27 = sshll.u32 [#allocation5], 4
      %s28 = int_to_ptr.vmem [resolvable:$true] %s27
      %30 = dma.hbm_to_vmem [thread:$0]  %s1, 64, %s28, [#allocation6]
    $region9: #{tpu_custom_call.1} parent=1 // pred_fallthru
      _
    // Predicated region
    $region10: #{tpu_custom_call.1} parent=1 // pred_check
      _
    $region11: #{tpu_custom_call.1} parent=1 // pred_check_branch
      %32 = sbr.rel (0) target = $region13
    $region12: #{tpu_custom_call.1} parent=1 // pred_region
      _
    $region13: #{tpu_custom_call.1} parent=1 // pred_fallthru
      _
    // Predicated region
    $region14: #{tpu_custom_call.1} parent=1 // pred_check
      _
    $region15: #{tpu_custom_call.1} parent=1 // pred_check_branch
      %34 = sbr.rel (0) target = $region17
    $region16: #{tpu_custom_call.1} parent=1 // pred_region
      %35 = dma.done [#allocation3], 64
    $region17: #{tpu_custom_call.1} parent=1 // pred_fallthru
      _
    // Predicated region
    $region18: #{tpu_custom_call.1} parent=1 // pred_check
      _
    $region19: #{tpu_custom_call.1} parent=1 // pred_check_branch
      %37 = sbr.rel (0) target = $region21
    $region20: #{tpu_custom_call.1} parent=1 // pred_region
      %38 = dma.done [#allocation6], 64
    $region21: #{tpu_custom_call.1} parent=1 // pred_fallthru
      _
    %v39 = vld [vmem:[%s2] sm:$0x1]
    %v40 = vld [vmem:[#allocation2] sm:$0xf]
    %v41 = vld [vmem:[#allocation5] sm:$0x1]
    %43 = vset.pattern.permute.xlu0 0
    %44 = vperm.xlu0 %43, %v40
    %v45 = vpop.permute.xlu0 %44
    %v47 = vlaneseq
    %v48 = vshrl.u32 %v47, 7
    %v49 = vsub.s32 0, %v48
    %v50 = vrot.slane %v41, %v49
    %v51 = vmul.f32 %v45, %v50
    %v53 = vlaneseq
    %v54 = vshrl.u32 %v53, 7
    %v55 = vsub.s32 0, %v54
    %v56 = vrot.slane %v39, %v55
    %v58 = vadd.f32 %v56, %v51
    %v59 = vld [vmem:[#allocation5 + $0x1] sm:$0x1]
    %60 = vset.pattern.permute.xlu0 1
    %61 = vperm.xlu0 %60, %v40
    %v62 = vpop.permute.xlu0 %61
    %v64 = vlaneseq
    %v65 = vshrl.u32 %v64, 7
    %v66 = vsub.s32 0, %v65
    %v67 = vrot.slane %v59, %v66
    %v68 = vmul.f32 %v62, %v67
    %v69 = vadd.f32 %v58, %v68
    %v70 = vld [vmem:[#allocation5 + $0x2] sm:$0x1]
    %71 = vset.pattern.permute.xlu0 2
    %72 = vperm.xlu0 %71, %v40
    %v73 = vpop.permute.xlu0 %72
    %v75 = vlaneseq
    %v76 = vshrl.u32 %v75, 7
    %v77 = vsub.s32 0, %v76
    %v78 = vrot.slane %v70, %v77
    %v79 = vmul.f32 %v73, %v78
    %v80 = vadd.f32 %v69, %v79
    %v81 = vmul.f32 %v80, %v80
    %v82 = vmul.f32 %v80, %v81
    %v83 = vmul.f32 %v82, 0.044715
    %v84 = vadd.f32 %v80, %v83
    %v85 = vmul.f32 %v84, 0.7978846
    %v86 = vtanh.pop %v85
    %v87 = vmul.f32 %v80, 0.5
    %v88 = vadd.f32 %v86, 1.0
    %v89 = vmul.f32 %v87, %v88
    %vm90 = vcmask 60416
    %91 = vst.msk [vmem:[#allocation7] sm:$0xf] %vm90, %v89
    // Predicated region
    $region22: #{tpu_custom_call.1} parent=1 // pred_check
      _
    $region23: #{tpu_custom_call.1} parent=1 // pred_check_branch
      %93 = sbr.rel (0) target = $region25
    $region24: #{tpu_custom_call.1} parent=1 // pred_region
      %s95 = ssub.s32 64, 64
      %96 = vsyncadd [#allocation4], %s95
      %s98 = sshll.u32 [#allocation7], 4
      %s99 = int_to_ptr.vmem [resolvable:$true] %s98
      %101 = dma.vmem_to_hbm [thread:$0]  %s99, 64, %s3, [#allocation4]
    $region25: #{tpu_custom_call.1} parent=1 // pred_fallthru
      _
    // Predicated region
    $region26: #{tpu_custom_call.1} parent=1 // pred_check
      _
    $region27: #{tpu_custom_call.1} parent=1 // pred_check_branch
      %103 = sbr.rel (0) target = $region29
    $region28: #{tpu_custom_call.1} parent=1 // pred_region
      %104 = dma.done [#allocation4], 64
    $region29: #{tpu_custom_call.1} parent=1 // pred_fallthru
      _
    %105 = vsyncpa [#allocation3], 1
    %106 = vsyncpa [#allocation6], 1
    %107 = vsyncpa [#allocation4], 1

</llo_original>
